<compile_context>
chip_gen: v6e
topology: v6e:2x2x1
jax: 0.10.0
libtpu: 0.0.40
codegen_flags: <defaults>
</compile_context>

<pallas_src>
import functools

import jax
import jax.numpy as jnp
import numpy as np
from jax.experimental import pallas as pl
from jax.experimental.pallas import tpu as pltpu


# ------------------------------ Pallas kernel -------------------------------

def fused_conv_bn_relu_kernel(x_ref, w_ref, p_ref, o_ref, slab_ref, *,
                              n_batch, cin, cin_pad, h_img, w_img,
                              eps, inv_count):
    """Fused 3x3/s1/p1 conv (in-kernel im2col + one matmul) + BN + ReLU.

    x_ref   : (N, Cin, HW + 2*(W+1))   per-sample, row-zero-padded, flattened
                                       (y, x) lane axis (lane-dense)
    w_ref   : (Cout, 9*cin_pad)        conv weights, K = tap*cin_pad + ci,
                                       zero-padded for ci >= Cin
    p_ref   : (Cout, 2)                BN params: [:,0]=gamma, [:,1]=beta
    o_ref   : (N, Cout, HW)            output, channels-first per sample
    slab_ref: (9*cin_pad, N*HW)        VMEM scratch: im2col slab (tile-aligned K)
    """
    hw = h_img * w_img

    # Zero the slab once: keeps the ci >= Cin zero-pad rows finite (their
    # matching weight columns are zero), allocated tile-aligned so Mosaic
    # never re-layouts the matmul K operand.
    slab_ref[...] = jnp.zeros_like(slab_ref)

    # x coordinate of every lane (lane l = y*W + x) for the horizontal masks.
    col = jax.lax.broadcasted_iota(jnp.int32, (cin, hw), 1)
    if (w_img & (w_img - 1)) == 0:
        xcoord = jnp.bitwise_and(col, w_img - 1)
    else:
        xcoord = col % w_img
    not_left_edge = xcoord >= 1              # valid when reading x-1
    not_right_edge = xcoord <= w_img - 2     # valid when reading x+1

    # In-kernel im2col: 9 static lane-offset slices per sample.  Row (y)
    # padding is already materialized in x_ref, so only the x boundary needs a
    # mask.  All slab stores are sublane- (multiple of 8) and lane- (multiple
    # of HW) aligned.
    for n in range(n_batch):
        xn = x_ref[n]                                    # (Cin, HW + 2*(W+1))
        for kh in range(3):
            for kw in range(3):
                t = kh * 3 + kw
                start = kh * w_img + kw
                tap = xn[:, start:start + hw]            # (Cin, HW)
                if kw == 0:
                    tap = jnp.where(not_left_edge, tap, 0.0)
                elif kw == 2:
                    tap = jnp.where(not_right_edge, tap, 0.0)
                slab_ref[t * cin_pad: t * cin_pad + cin,
                         n * hw: (n + 1) * hw] = tap

    # Single MXU matmul for the whole batch, f32 accumulation.
    # TODO(synk): at larger shapes, cast the slab/weights to bf16 (keep f32
    # accumulation and BN stats) to halve DMA bytes and double MXU rate on
    # v6e/v7x; unnecessary at this size.
    conv = jnp.dot(w_ref[...], slab_ref[...],
                   preferred_element_type=jnp.float32)   # (Cout, N*HW)

    # BatchNorm training-mode statistics (biased variance), one traversal.
    s1 = jnp.sum(conv, axis=1, keepdims=True)            # (Cout, 1)
    s2 = jnp.sum(conv * conv, axis=1, keepdims=True)     # (Cout, 1)
    mean = s1 * inv_count
    var = s2 * inv_count - mean * mean
    inv_std = jax.lax.rsqrt(var + eps)                   # EUP op

    params = p_ref[...]                                  # (Cout, 2)
    gamma = params[:, 0:1]
    beta = params[:, 1:2]
    a = gamma * inv_std                                  # (Cout, 1)
    b = beta - mean * a                                  # (Cout, 1)
    y = jnp.maximum(conv * a + b, 0.0)                   # (Cout, N*HW)

    # Lane-aligned per-sample stores: output is already (N, Cout, HW).
    for n in range(n_batch):
        o_ref[n] = y[:, n * hw: (n + 1) * hw]


# --------------------------------- wrapper ----------------------------------

@functools.partial(jax.jit, static_argnames=("eps",))
def conv_bn_relu(x_nchw, w_oihw, gamma, beta, eps=1e-5):
    """ConvBNRelu forward. x_nchw: (N, Cin, H, W) -> (N, Cout, H, W).

    Note: the Conv2d bias is intentionally not an argument — under training-
    mode BatchNorm it cancels exactly in the centering step.
    """
    N, Cin, H, W = x_nchw.shape
    Cout = w_oihw.shape[0]
    HW = H * W
    cin_pad = -(-Cin // 8) * 8        # pad each tap's Cin to a sublane tile

    x = x_nchw.astype(jnp.float32)
    # Per-sample flattened (y, x) lane vector with (W+1) zeros on each side:
    # vertical conv padding then becomes a pure static lane shift in-kernel.
    xlin = jnp.pad(x.reshape(N, Cin, HW), ((0, 0), (0, 0), (W + 1, W + 1)))

    # Weights: K = tap*cin_pad + ci (tap = kh*3 + kw), zero-padded per tap so
    # the in-kernel slab's K axis stays (8,128)-tile aligned.
    w_t = jnp.transpose(w_oihw.astype(jnp.float32), (0, 2, 3, 1))   # (O,3,3,I)
    w_t = w_t.reshape(Cout, 9, Cin)
    w2 = jnp.pad(w_t, ((0, 0), (0, 0), (0, cin_pad - Cin)))
    w2 = w2.reshape(Cout, 9 * cin_pad)

    params = jnp.stack([gamma.astype(jnp.float32),
                        beta.astype(jnp.float32)], axis=1)          # (Cout, 2)

    kern = functools.partial(
        fused_conv_bn_relu_kernel,
        n_batch=N, cin=Cin, cin_pad=cin_pad, h_img=H, w_img=W,
        eps=float(eps), inv_count=1.0 / (N * HW))

    # TODO(synk): at larger H*W / N, add a lane-tile grid (two-pass BN stats,
    # dimension_semantics=("parallel", ...) for v7x's 2 TCs) and re-derive the
    # tile size per generation (64 MiB VMEM on v7x vs 128 MiB on v5e/v6e);
    # at ~0.2 MiB total a single invocation is fastest.
    out = pl.pallas_call(
        kern,
        out_shape=jax.ShapeDtypeStruct((N, Cout, HW), jnp.float32),
        in_specs=[pl.BlockSpec(memory_space=pltpu.MemorySpace.VMEM)] * 3,
        out_specs=pl.BlockSpec(memory_space=pltpu.MemorySpace.VMEM),
        scratch_shapes=[pltpu.VMEM((9 * cin_pad, N * HW), jnp.float32)],
    )(xlin, w2, params)

    return out.reshape(N, Cout, H, W)


# -------------------------- reference (plain JAX) ---------------------------

def conv_bn_relu_ref(x_nchw, w_oihw, conv_b, gamma, beta, eps=1e-5):
    conv = jax.lax.conv_general_dilated(
        x_nchw, w_oihw, window_strides=(1, 1), padding="SAME",
        dimension_numbers=("NCHW", "OIHW", "NCHW"))
    conv = conv + conv_b[None, :, None, None]
    mean = jnp.mean(conv, axis=(0, 2, 3), keepdims=True)
    var = jnp.mean((conv - mean) ** 2, axis=(0, 2, 3), keepdims=True)
    xn = (conv - mean) / jnp.sqrt(var + eps)
    out = xn * gamma[None, :, None, None] + beta[None, :, None, None]
    return jnp.maximum(out, 0.0)


# ----------------------------------- main ------------------------------------

if __name__ == "__main__":
    # ConvBNRelu(channelx=(4, 8), stridex=1, kernelx=3, paddingx=1)
    N, Cin, Cout, H, W = 2, 4, 8, 16, 16

    key = jax.random.PRNGKey(0)
    kx, kw = jax.random.split(key)

    x = jax.random.normal(kx, (N, Cin, H, W), dtype=jnp.float32)

    # deterministic parameter init mirroring the module's __init__:
    #   kaiming_normal_ (fan_in, relu): std = sqrt(2 / (Cin*3*3)); bias = 0.01
    fan_in = Cin * 3 * 3
    w = jax.random.normal(kw, (Cout, Cin, 3, 3), dtype=jnp.float32) * jnp.sqrt(
        2.0 / fan_in)
    conv_b = jnp.full((Cout,), 0.01, dtype=jnp.float32)  # cancels under batch-stat BN
    gamma = jnp.ones((Cout,), dtype=jnp.float32)   # BatchNorm2d default weight
    beta = jnp.zeros((Cout,), dtype=jnp.float32)   # BatchNorm2d default bias

    out = conv_bn_relu(x, w, gamma, beta)
    out = jax.block_until_ready(out)

    ref = jax.block_until_ready(conv_bn_relu_ref(x, w, conv_b, gamma, beta))
    np.testing.assert_allclose(np.asarray(out), np.asarray(ref),
                               rtol=1e-4, atol=1e-4)

    print("KERNEL_OK")
</pallas_src>

<mosaic_0001>
module attributes {stable_mosaic.version = 11 : i64} {
  func.func @fused_conv_bn_relu_kernel(%arg0: memref<2x4x290xf32, #tpu.memory_space<vmem>>, %arg1: memref<8x72xf32, #tpu.memory_space<vmem>>, %arg2: memref<8x2xf32, #tpu.memory_space<vmem>>, %arg3: memref<2x8x256xf32, #tpu.memory_space<vmem>>, %arg4: memref<72x512xf32, #tpu.memory_space<vmem>>) attributes {dimension_semantics = [], scalar_prefetch = 0 : i64, scratch_operands = 1 : i64, tpu.core_type = #tpu.core_type<tc>} {
    %cst = arith.constant 0.000000e+00 : f32
    %0 = vector.broadcast %cst : f32 to vector<72x512xf32>
    %c0 = arith.constant 0 : index
    %c0_0 = arith.constant 0 : index
    %1 = vector.load %arg4[%c0, %c0_0] : memref<72x512xf32, #tpu.memory_space<vmem>>, vector<72x512xf32>
    tpu.vector_store %arg4[%c0, %c0_0], %0 {strides = array<i32>} : memref<72x512xf32, #tpu.memory_space<vmem>>, vector<72x512xf32>,
    %2 = tpu.iota {dimensions = array<i32: 1>} : vector<4x256xi32>
    %c15_i32 = arith.constant 15 : i32
    %3 = vector.broadcast %c15_i32 : i32 to vector<4x256xi32>
    %4 = arith.andi %2, %3 : vector<4x256xi32>
    %c1_i32 = arith.constant 1 : i32
    %5 = vector.broadcast %c1_i32 : i32 to vector<4x256xi32>
    %6 = arith.cmpi sge, %4, %5 : vector<4x256xi32>
    %c14_i32 = arith.constant 14 : i32
    %7 = vector.broadcast %c14_i32 : i32 to vector<4x256xi32>
    %8 = arith.cmpi sle, %4, %7 : vector<4x256xi32>
    %c0_1 = arith.constant 0 : index
    %c0_2 = arith.constant 0 : index
    %c0_3 = arith.constant 0 : index
    %9 = vector.load %arg0[%c0_1, %c0_2, %c0_3] : memref<2x4x290xf32, #tpu.memory_space<vmem>>, vector<1x4x290xf32>
    %10 = vector.shape_cast %9 : vector<1x4x290xf32> to vector<4x290xf32>
    %11 = vector.extract_strided_slice %10 {offsets = [0, 0], sizes = [4, 256], strides = [1, 1]} : vector<4x290xf32> to vector<4x256xf32>
    %cst_4 = arith.constant 0.000000e+00 : f32
    %12 = vector.broadcast %cst_4 : f32 to vector<4x256xf32>
    %13 = arith.select %6, %11, %12 : vector<4x256xi1>, vector<4x256xf32>
    %c0_5 = arith.constant 0 : index
    %c0_6 = arith.constant 0 : index
    %14 = vector.load %arg4[%c0_5, %c0_6] : memref<72x512xf32, #tpu.memory_space<vmem>>, vector<4x256xf32>
    tpu.vector_store %arg4[%c0_5, %c0_6], %13 {strides = array<i32>} : memref<72x512xf32, #tpu.memory_space<vmem>>, vector<4x256xf32>,
    %15 = vector.extract_strided_slice %10 {offsets = [0, 1], sizes = [4, 256], strides = [1, 1]} : vector<4x290xf32> to vector<4x256xf32>
    %c8 = arith.constant 8 : index
    %c0_7 = arith.constant 0 : index
    %16 = vector.load %arg4[%c8, %c0_7] : memref<72x512xf32, #tpu.memory_space<vmem>>, vector<4x256xf32>
    tpu.vector_store %arg4[%c8, %c0_7], %15 {strides = array<i32>} : memref<72x512xf32, #tpu.memory_space<vmem>>, vector<4x256xf32>,
    %17 = vector.extract_strided_slice %10 {offsets = [0, 2], sizes = [4, 256], strides = [1, 1]} : vector<4x290xf32> to vector<4x256xf32>
    %cst_8 = arith.constant 0.000000e+00 : f32
    %18 = vector.broadcast %cst_8 : f32 to vector<4x256xf32>
    %19 = arith.select %8, %17, %18 : vector<4x256xi1>, vector<4x256xf32>
    %c16 = arith.constant 16 : index
    %c0_9 = arith.constant 0 : index
    %20 = vector.load %arg4[%c16, %c0_9] : memref<72x512xf32, #tpu.memory_space<vmem>>, vector<4x256xf32>
    tpu.vector_store %arg4[%c16, %c0_9], %19 {strides = array<i32>} : memref<72x512xf32, #tpu.memory_space<vmem>>, vector<4x256xf32>,
    %21 = vector.extract_strided_slice %10 {offsets = [0, 16], sizes = [4, 256], strides = [1, 1]} : vector<4x290xf32> to vector<4x256xf32>
    %cst_10 = arith.constant 0.000000e+00 : f32
    %22 = vector.broadcast %cst_10 : f32 to vector<4x256xf32>
    %23 = arith.select %6, %21, %22 : vector<4x256xi1>, vector<4x256xf32>
    %c24 = arith.constant 24 : index
    %c0_11 = arith.constant 0 : index
    %24 = vector.load %arg4[%c24, %c0_11] : memref<72x512xf32, #tpu.memory_space<vmem>>, vector<4x256xf32>
    tpu.vector_store %arg4[%c24, %c0_11], %23 {strides = array<i32>} : memref<72x512xf32, #tpu.memory_space<vmem>>, vector<4x256xf32>,
    %25 = vector.extract_strided_slice %10 {offsets = [0, 17], sizes = [4, 256], strides = [1, 1]} : vector<4x290xf32> to vector<4x256xf32>
    %c32 = arith.constant 32 : index
    %c0_12 = arith.constant 0 : index
    %26 = vector.load %arg4[%c32, %c0_12] : memref<72x512xf32, #tpu.memory_space<vmem>>, vector<4x256xf32>
    tpu.vector_store %arg4[%c32, %c0_12], %25 {strides = array<i32>} : memref<72x512xf32, #tpu.memory_space<vmem>>, vector<4x256xf32>,
    %27 = vector.extract_strided_slice %10 {offsets = [0, 18], sizes = [4, 256], strides = [1, 1]} : vector<4x290xf32> to vector<4x256xf32>
    %cst_13 = arith.constant 0.000000e+00 : f32
    %28 = vector.broadcast %cst_13 : f32 to vector<4x256xf32>
    %29 = arith.select %8, %27, %28 : vector<4x256xi1>, vector<4x256xf32>
    %c40 = arith.constant 40 : index
    %c0_14 = arith.constant 0 : index
    %30 = vector.load %arg4[%c40, %c0_14] : memref<72x512xf32, #tpu.memory_space<vmem>>, vector<4x256xf32>
    tpu.vector_store %arg4[%c40, %c0_14], %29 {strides = array<i32>} : memref<72x512xf32, #tpu.memory_space<vmem>>, vector<4x256xf32>,
    %31 = vector.extract_strided_slice %10 {offsets = [0, 32], sizes = [4, 256], strides = [1, 1]} : vector<4x290xf32> to vector<4x256xf32>
    %cst_15 = arith.constant 0.000000e+00 : f32
    %32 = vector.broadcast %cst_15 : f32 to vector<4x256xf32>
    %33 = arith.select %6, %31, %32 : vector<4x256xi1>, vector<4x256xf32>
    %c48 = arith.constant 48 : index
    %c0_16 = arith.constant 0 : index
    %34 = vector.load %arg4[%c48, %c0_16] : memref<72x512xf32, #tpu.memory_space<vmem>>, vector<4x256xf32>
    tpu.vector_store %arg4[%c48, %c0_16], %33 {strides = array<i32>} : memref<72x512xf32, #tpu.memory_space<vmem>>, vector<4x256xf32>,
    %35 = vector.extract_strided_slice %10 {offsets = [0, 33], sizes = [4, 256], strides = [1, 1]} : vector<4x290xf32> to vector<4x256xf32>
    %c56 = arith.constant 56 : index
    %c0_17 = arith.constant 0 : index
    %36 = vector.load %arg4[%c56, %c0_17] : memref<72x512xf32, #tpu.memory_space<vmem>>, vector<4x256xf32>
    tpu.vector_store %arg4[%c56, %c0_17], %35 {strides = array<i32>} : memref<72x512xf32, #tpu.memory_space<vmem>>, vector<4x256xf32>,
    %37 = vector.extract_strided_slice %10 {offsets = [0, 34], sizes = [4, 256], strides = [1, 1]} : vector<4x290xf32> to vector<4x256xf32>
    %cst_18 = arith.constant 0.000000e+00 : f32
    %38 = vector.broadcast %cst_18 : f32 to vector<4x256xf32>
    %39 = arith.select %8, %37, %38 : vector<4x256xi1>, vector<4x256xf32>
    %c64 = arith.constant 64 : index
    %c0_19 = arith.constant 0 : index
    %40 = vector.load %arg4[%c64, %c0_19] : memref<72x512xf32, #tpu.memory_space<vmem>>, vector<4x256xf32>
    tpu.vector_store %arg4[%c64, %c0_19], %39 {strides = array<i32>} : memref<72x512xf32, #tpu.memory_space<vmem>>, vector<4x256xf32>,
    %c1 = arith.constant 1 : index
    %c0_20 = arith.constant 0 : index
    %c0_21 = arith.constant 0 : index
    %41 = vector.load %arg0[%c1, %c0_20, %c0_21] : memref<2x4x290xf32, #tpu.memory_space<vmem>>, vector<1x4x290xf32>
    %42 = vector.shape_cast %41 : vector<1x4x290xf32> to vector<4x290xf32>
    %43 = vector.extract_strided_slice %42 {offsets = [0, 0], sizes = [4, 256], strides = [1, 1]} : vector<4x290xf32> to vector<4x256xf32>
    %cst_22 = arith.constant 0.000000e+00 : f32
    %44 = vector.broadcast %cst_22 : f32 to vector<4x256xf32>
    %45 = arith.select %6, %43, %44 : vector<4x256xi1>, vector<4x256xf32>
    %c0_23 = arith.constant 0 : index
    %c256 = arith.constant 256 : index
    %46 = vector.load %arg4[%c0_23, %c256] : memref<72x512xf32, #tpu.memory_space<vmem>>, vector<4x256xf32>
    tpu.vector_store %arg4[%c0_23, %c256], %45 {strides = array<i32>} : memref<72x512xf32, #tpu.memory_space<vmem>>, vector<4x256xf32>,
    %47 = vector.extract_strided_slice %42 {offsets = [0, 1], sizes = [4, 256], strides = [1, 1]} : vector<4x290xf32> to vector<4x256xf32>
    %c8_24 = arith.constant 8 : index
    %c256_25 = arith.constant 256 : index
    %48 = vector.load %arg4[%c8_24, %c256_25] : memref<72x512xf32, #tpu.memory_space<vmem>>, vector<4x256xf32>
    tpu.vector_store %arg4[%c8_24, %c256_25], %47 {strides = array<i32>} : memref<72x512xf32, #tpu.memory_space<vmem>>, vector<4x256xf32>,
    %49 = vector.extract_strided_slice %42 {offsets = [0, 2], sizes = [4, 256], strides = [1, 1]} : vector<4x290xf32> to vector<4x256xf32>
    %cst_26 = arith.constant 0.000000e+00 : f32
    %50 = vector.broadcast %cst_26 : f32 to vector<4x256xf32>
    %51 = arith.select %8, %49, %50 : vector<4x256xi1>, vector<4x256xf32>
    %c16_27 = arith.constant 16 : index
    %c256_28 = arith.constant 256 : index
    %52 = vector.load %arg4[%c16_27, %c256_28] : memref<72x512xf32, #tpu.memory_space<vmem>>, vector<4x256xf32>
    tpu.vector_store %arg4[%c16_27, %c256_28], %51 {strides = array<i32>} : memref<72x512xf32, #tpu.memory_space<vmem>>, vector<4x256xf32>,
    %53 = vector.extract_strided_slice %42 {offsets = [0, 16], sizes = [4, 256], strides = [1, 1]} : vector<4x290xf32> to vector<4x256xf32>
    %cst_29 = arith.constant 0.000000e+00 : f32
    %54 = vector.broadcast %cst_29 : f32 to vector<4x256xf32>
    %55 = arith.select %6, %53, %54 : vector<4x256xi1>, vector<4x256xf32>
    %c24_30 = arith.constant 24 : index
    %c256_31 = arith.constant 256 : index
    %56 = vector.load %arg4[%c24_30, %c256_31] : memref<72x512xf32, #tpu.memory_space<vmem>>, vector<4x256xf32>
    tpu.vector_store %arg4[%c24_30, %c256_31], %55 {strides = array<i32>} : memref<72x512xf32, #tpu.memory_space<vmem>>, vector<4x256xf32>,
    %57 = vector.extract_strided_slice %42 {offsets = [0, 17], sizes = [4, 256], strides = [1, 1]} : vector<4x290xf32> to vector<4x256xf32>
    %c32_32 = arith.constant 32 : index
    %c256_33 = arith.constant 256 : index
    %58 = vector.load %arg4[%c32_32, %c256_33] : memref<72x512xf32, #tpu.memory_space<vmem>>, vector<4x256xf32>
    tpu.vector_store %arg4[%c32_32, %c256_33], %57 {strides = array<i32>} : memref<72x512xf32, #tpu.memory_space<vmem>>, vector<4x256xf32>,
    %59 = vector.extract_strided_slice %42 {offsets = [0, 18], sizes = [4, 256], strides = [1, 1]} : vector<4x290xf32> to vector<4x256xf32>
    %cst_34 = arith.constant 0.000000e+00 : f32
    %60 = vector.broadcast %cst_34 : f32 to vector<4x256xf32>
    %61 = arith.select %8, %59, %60 : vector<4x256xi1>, vector<4x256xf32>
    %c40_35 = arith.constant 40 : index
    %c256_36 = arith.constant 256 : index
    %62 = vector.load %arg4[%c40_35, %c256_36] : memref<72x512xf32, #tpu.memory_space<vmem>>, vector<4x256xf32>
    tpu.vector_store %arg4[%c40_35, %c256_36], %61 {strides = array<i32>} : memref<72x512xf32, #tpu.memory_space<vmem>>, vector<4x256xf32>,
    %63 = vector.extract_strided_slice %42 {offsets = [0, 32], sizes = [4, 256], strides = [1, 1]} : vector<4x290xf32> to vector<4x256xf32>
    %cst_37 = arith.constant 0.000000e+00 : f32
    %64 = vector.broadcast %cst_37 : f32 to vector<4x256xf32>
    %65 = arith.select %6, %63, %64 : vector<4x256xi1>, vector<4x256xf32>
    %c48_38 = arith.constant 48 : index
    %c256_39 = arith.constant 256 : index
    %66 = vector.load %arg4[%c48_38, %c256_39] : memref<72x512xf32, #tpu.memory_space<vmem>>, vector<4x256xf32>
    tpu.vector_store %arg4[%c48_38, %c256_39], %65 {strides = array<i32>} : memref<72x512xf32, #tpu.memory_space<vmem>>, vector<4x256xf32>,
    %67 = vector.extract_strided_slice %42 {offsets = [0, 33], sizes = [4, 256], strides = [1, 1]} : vector<4x290xf32> to vector<4x256xf32>
    %c56_40 = arith.constant 56 : index
    %c256_41 = arith.constant 256 : index
    %68 = vector.load %arg4[%c56_40, %c256_41] : memref<72x512xf32, #tpu.memory_space<vmem>>, vector<4x256xf32>
    tpu.vector_store %arg4[%c56_40, %c256_41], %67 {strides = array<i32>} : memref<72x512xf32, #tpu.memory_space<vmem>>, vector<4x256xf32>,
    %69 = vector.extract_strided_slice %42 {offsets = [0, 34], sizes = [4, 256], strides = [1, 1]} : vector<4x290xf32> to vector<4x256xf32>
    %cst_42 = arith.constant 0.000000e+00 : f32
    %70 = vector.broadcast %cst_42 : f32 to vector<4x256xf32>
    %71 = arith.select %8, %69, %70 : vector<4x256xi1>, vector<4x256xf32>
    %c64_43 = arith.constant 64 : index
    %c256_44 = arith.constant 256 : index
    %72 = vector.load %arg4[%c64_43, %c256_44] : memref<72x512xf32, #tpu.memory_space<vmem>>, vector<4x256xf32>
    tpu.vector_store %arg4[%c64_43, %c256_44], %71 {strides = array<i32>} : memref<72x512xf32, #tpu.memory_space<vmem>>, vector<4x256xf32>,
    %c0_45 = arith.constant 0 : index
    %c0_46 = arith.constant 0 : index
    %73 = vector.load %arg1[%c0_45, %c0_46] : memref<8x72xf32, #tpu.memory_space<vmem>>, vector<8x72xf32>
    %c0_47 = arith.constant 0 : index
    %c0_48 = arith.constant 0 : index
    %74 = vector.load %arg4[%c0_47, %c0_48] : memref<72x512xf32, #tpu.memory_space<vmem>>, vector<72x512xf32>
    %cst_49 = arith.constant dense<0.000000e+00> : vector<8x512xf32>
    %75 = tpu.matmul %73, %74, %cst_49 {dimension_numbers = #tpu.dot_dimension_numbers<[1], [0], [0], [1], [0, 0, 1, 1], [], []>} : vector<8x72xf32>, vector<72x512xf32>, vector<8x512xf32> -> vector<8x512xf32>
    %cst_50 = arith.constant dense<0.000000e+00> : vector<8xf32>
    %76 = vector.multi_reduction <add>, %75, %cst_50 [1] : vector<8x512xf32> to vector<8xf32>
    %77 = vector.shape_cast %76 : vector<8xf32> to vector<8x1xf32>
    %78 = arith.mulf %75, %75 : vector<8x512xf32>
    %cst_51 = arith.constant dense<0.000000e+00> : vector<8xf32>
    %79 = vector.multi_reduction <add>, %78, %cst_51 [1] : vector<8x512xf32> to vector<8xf32>
    %80 = vector.shape_cast %79 : vector<8xf32> to vector<8x1xf32>
    %cst_52 = arith.constant 0.001953125 : f32
    %81 = vector.broadcast %cst_52 : f32 to vector<8x1xf32>
    %82 = arith.mulf %77, %81 : vector<8x1xf32>
    %cst_53 = arith.constant 0.001953125 : f32
    %83 = vector.broadcast %cst_53 : f32 to vector<8x1xf32>
    %84 = arith.mulf %80, %83 : vector<8x1xf32>
    %85 = arith.mulf %82, %82 : vector<8x1xf32>
    %86 = arith.subf %84, %85 : vector<8x1xf32>
    %cst_54 = arith.constant 9.99999974E-6 : f32
    %87 = vector.broadcast %cst_54 : f32 to vector<8x1xf32>
    %88 = arith.addf %86, %87 : vector<8x1xf32>
    %89 = math.rsqrt %88 : vector<8x1xf32>
    %c0_55 = arith.constant 0 : index
    %c0_56 = arith.constant 0 : index
    %90 = vector.load %arg2[%c0_55, %c0_56] : memref<8x2xf32, #tpu.memory_space<vmem>>, vector<8x2xf32>
    %91 = vector.extract_strided_slice %90 {offsets = [0, 0], sizes = [8, 1], strides = [1, 1]} : vector<8x2xf32> to vector<8x1xf32>
    %92 = vector.extract_strided_slice %90 {offsets = [0, 1], sizes = [8, 1], strides = [1, 1]} : vector<8x2xf32> to vector<8x1xf32>
    %93 = arith.mulf %91, %89 : vector<8x1xf32>
    %94 = arith.mulf %82, %93 : vector<8x1xf32>
    %95 = arith.subf %92, %94 : vector<8x1xf32>
    %96 = vector.broadcast %93 : vector<8x1xf32> to vector<8x512xf32>
    %97 = arith.mulf %75, %96 : vector<8x512xf32>
    %98 = vector.broadcast %95 : vector<8x1xf32> to vector<8x512xf32>
    %99 = arith.addf %97, %98 : vector<8x512xf32>
    %cst_57 = arith.constant 0.000000e+00 : f32
    %100 = vector.broadcast %cst_57 : f32 to vector<8x512xf32>
    %101 = arith.maximumf %99, %100 : vector<8x512xf32>
    %102 = vector.extract_strided_slice %101 {offsets = [0, 0], sizes = [8, 256], strides = [1, 1]} : vector<8x512xf32> to vector<8x256xf32>
    %c0_58 = arith.constant 0 : index
    %c0_59 = arith.constant 0 : index
    %c0_60 = arith.constant 0 : index
    %103 = vector.load %arg3[%c0_58, %c0_59, %c0_60] : memref<2x8x256xf32, #tpu.memory_space<vmem>>, vector<1x8x256xf32>
    %104 = vector.shape_cast %103 : vector<1x8x256xf32> to vector<8x256xf32>
    %105 = vector.shape_cast %102 : vector<8x256xf32> to vector<1x8x256xf32>
    tpu.vector_store %arg3[%c0_58, %c0_59, %c0_60], %105 {strides = array<i32>} : memref<2x8x256xf32, #tpu.memory_space<vmem>>, vector<1x8x256xf32>,
    %106 = vector.extract_strided_slice %101 {offsets = [0, 256], sizes = [8, 256], strides = [1, 1]} : vector<8x512xf32> to vector<8x256xf32>
    %c1_61 = arith.constant 1 : index
    %c0_62 = arith.constant 0 : index
    %c0_63 = arith.constant 0 : index
    %107 = vector.load %arg3[%c1_61, %c0_62, %c0_63] : memref<2x8x256xf32, #tpu.memory_space<vmem>>, vector<1x8x256xf32>
    %108 = vector.shape_cast %107 : vector<1x8x256xf32> to vector<8x256xf32>
    %109 = vector.shape_cast %106 : vector<8x256xf32> to vector<1x8x256xf32>
    tpu.vector_store %arg3[%c1_61, %c0_62, %c0_63], %109 {strides = array<i32>} : memref<2x8x256xf32, #tpu.memory_space<vmem>>, vector<1x8x256xf32>,
    return
  }
}

</mosaic_0001>

<llo_original>
// kernel: conv_bn_relu.1
$region0: #{conv_bn_relu.1}
  #allocation0 [shape = 'u32[]', space=smem, size = 0x4, offset = 0x4, fixed_abs, tag = 'smem constant byte address 0x4 - core index']
  #allocation1 [shape = 'u32[144,128]{1,0:T(1,128)}', space=vmem, size = 0x12000, scoped, tag = 'internal scratch']
  #allocation2 [shape = 'f32[72,512]{1,0:T(8,128)}', space=vmem, size = 0x24000, scoped, tag = 'scratch operand']
  %s0 = inlined_call_operand.vmem [shape: f32[2,4,290], index: 0, kind: input, shape index: {}]
  %s1 = inlined_call_operand.vmem [shape: f32[8,72], index: 1, kind: input, shape index: {}]
  %s2 = inlined_call_operand.vmem [shape: f32[8,2], index: 2, kind: input, shape index: {}]
  %s3 = inlined_call_operand.vmem [shape: f32[2,8,256], index: 3, kind: output, shape index: {}]
  %s4 = sld [smem:[#allocation0]]
  $region22: #{conv_bn_relu.1} parent=0
    _
  %s6 = ssub.s32 1, %s4
  %s7 = scalar_select 0, %s6, %s4
  // Predicated region
  $region2: #{conv_bn_relu.1} parent=0 // pred_check
    _
  $region3: #{conv_bn_relu.1} parent=0 // pred_check_branch
    %9 = sbr.rel (0) target = $region5
  $region4: #{conv_bn_relu.1} parent=0 // pred_region
    _
  $region5: #{conv_bn_relu.1} parent=0 // pred_fallthru
    _
  // Predicated region
  $region6: #{conv_bn_relu.1} parent=0 // pred_check
    _
  $region7: #{conv_bn_relu.1} parent=0 // pred_check_branch
    %11 = sbr.rel (0) target = $region9
  $region8: #{conv_bn_relu.1} parent=0 // pred_region
    _
  $region9: #{conv_bn_relu.1} parent=0 // pred_fallthru
    _
  // Predicated region
  $region10: #{conv_bn_relu.1} parent=0 // pred_check
    _
  $region11: #{conv_bn_relu.1} parent=0 // pred_check_branch
    %13 = sbr.rel (0) target = $region13
  $region12: #{conv_bn_relu.1} parent=0 // pred_region
    _
  $region13: #{conv_bn_relu.1} parent=0 // pred_fallthru
    _
  %14 = vst [vmem:[#allocation2] sm:$0xff] 0.0
  %15 = vst [vmem:[#allocation2 + $0x8] sm:$0xff] 0.0
  %16 = vst [vmem:[#allocation2 + $0x10] sm:$0xff] 0.0
  %17 = vst [vmem:[#allocation2 + $0x18] sm:$0xff] 0.0
  %18 = vst [vmem:[#allocation2 + $0x20] sm:$0xff] 0.0
  %19 = vst [vmem:[#allocation2 + $0x28] sm:$0xff] 0.0
  %20 = vst [vmem:[#allocation2 + $0x30] sm:$0xff] 0.0
  %21 = vst [vmem:[#allocation2 + $0x38] sm:$0xff] 0.0
  %22 = vst [vmem:[#allocation2 + $0x40] sm:$0xff] 0.0
  %23 = vst [vmem:[#allocation2 + $0x48] sm:$0xff] 0.0
  %24 = vst [vmem:[#allocation2 + $0x50] sm:$0xff] 0.0
  %25 = vst [vmem:[#allocation2 + $0x58] sm:$0xff] 0.0
  %26 = vst [vmem:[#allocation2 + $0x60] sm:$0xff] 0.0
  %27 = vst [vmem:[#allocation2 + $0x68] sm:$0xff] 0.0
  %28 = vst [vmem:[#allocation2 + $0x70] sm:$0xff] 0.0
  %29 = vst [vmem:[#allocation2 + $0x78] sm:$0xff] 0.0
  %30 = vst [vmem:[#allocation2 + $0x80] sm:$0xff] 0.0
  %31 = vst [vmem:[#allocation2 + $0x88] sm:$0xff] 0.0
  %32 = vst [vmem:[#allocation2 + $0x90] sm:$0xff] 0.0
  %33 = vst [vmem:[#allocation2 + $0x98] sm:$0xff] 0.0
  %34 = vst [vmem:[#allocation2 + $0xa0] sm:$0xff] 0.0
  %35 = vst [vmem:[#allocation2 + $0xa8] sm:$0xff] 0.0
  %36 = vst [vmem:[#allocation2 + $0xb0] sm:$0xff] 0.0
  %37 = vst [vmem:[#allocation2 + $0xb8] sm:$0xff] 0.0
  %38 = vst [vmem:[#allocation2 + $0xc0] sm:$0xff] 0.0
  %39 = vst [vmem:[#allocation2 + $0xc8] sm:$0xff] 0.0
  %40 = vst [vmem:[#allocation2 + $0xd0] sm:$0xff] 0.0
  %41 = vst [vmem:[#allocation2 + $0xd8] sm:$0xff] 0.0
  %42 = vst [vmem:[#allocation2 + $0xe0] sm:$0xff] 0.0
  %43 = vst [vmem:[#allocation2 + $0xe8] sm:$0xff] 0.0
  %44 = vst [vmem:[#allocation2 + $0xf0] sm:$0xff] 0.0
  %45 = vst [vmem:[#allocation2 + $0xf8] sm:$0xff] 0.0
  %46 = vst [vmem:[#allocation2 + $0x100] sm:$0xff] 0.0
  %47 = vst [vmem:[#allocation2 + $0x108] sm:$0xff] 0.0
  %48 = vst [vmem:[#allocation2 + $0x110] sm:$0xff] 0.0
  %49 = vst [vmem:[#allocation2 + $0x118] sm:$0xff] 0.0
  %v50 = vlaneseq
  %v51 = vand.u32 %v50, 127
  %v52 = vadd.s32 %v51, 128
  %v53 = vand.u32 %v51, 15
  %v54 = vand.u32 %v52, 15
  %vm55 = vcmp.ge.s32.totalorder %v53, 1
  %vm56 = vcmp.ge.s32.totalorder %v54, 1
  %vm57 = vcmp.le.s32.totalorder %v53, 14
  %vm58 = vcmp.le.s32.totalorder %v54, 14
  %v59 = vld [vmem:[%s0] sm:$0xff]
  %v60 = vld [vmem:[%s0 + $0x8] sm:$0xf]
  %v62 = vcombine.high %v59, %v59
  %v64 = vsel %vm55, %v59, 0.0
  %v65 = vsel %vm56, %v62, 0.0
  %66 = vst [vmem:[#allocation2] sm:$0xf] %v64
  %67 = vst [vmem:[#allocation2 + $0x8] sm:$0xf] %v65
  %69 = vrot.lane.b32.xlu0 %v59, 127
  %v70 = vpop.permute.xlu0 %69
  %71 = vrot.lane.b32.xlu0 %v62, 127
  %v72 = vpop.permute.xlu0 %71
  %73 = vrot.lane.b32.xlu0 %v60, 127
  %v74 = vpop.permute.xlu0 %73
  %vm75 = vcmask 1039360
  %v76 = vsel %vm75, %v70, %v72
  %v77 = vsel %vm75, %v72, %v74
  %80 = vst [vmem:[#allocation2 + $0x20] sm:$0xf] %v76
  %81 = vst [vmem:[#allocation2 + $0x28] sm:$0xf] %v77
  %82 = vrot.lane.b32.xlu0 %v59, 126
  %v83 = vpop.permute.xlu0 %82
  %84 = vrot.lane.b32.xlu0 %v62, 126
  %v85 = vpop.permute.xlu0 %84
  %86 = vrot.lane.b32.xlu0 %v60, 126
  %v87 = vpop.permute.xlu0 %86
  %vm88 = vcmask 1031168
  %v89 = vsel %vm88, %v83, %v85
  %v90 = vsel %vm88, %v85, %v87
  %v93 = vsel %vm57, %v89, 0.0
  %v94 = vsel %vm58, %v90, 0.0
  %95 = vst [vmem:[#allocation2 + $0x40] sm:$0xf] %v93
  %96 = vst [vmem:[#allocation2 + $0x48] sm:$0xf] %v94
  %97 = vrot.lane.b32.xlu0 %v59, 112
  %v98 = vpop.permute.xlu0 %97
  %99 = vrot.lane.b32.xlu0 %v62, 112
  %v100 = vpop.permute.xlu0 %99
  %101 = vrot.lane.b32.xlu0 %v60, 112
  %v102 = vpop.permute.xlu0 %101
  %vm103 = vcmask 916480
  %v104 = vsel %vm103, %v98, %v100
  %v105 = vsel %vm103, %v100, %v102
  %v108 = vsel %vm55, %v104, 0.0
  %v109 = vsel %vm56, %v105, 0.0
  %110 = vst [vmem:[#allocation2 + $0x60] sm:$0xf] %v108
  %111 = vst [vmem:[#allocation2 + $0x68] sm:$0xf] %v109
  %112 = vrot.lane.b32.xlu0 %v59, 111
  %v113 = vpop.permute.xlu0 %112
  %114 = vrot.lane.b32.xlu0 %v62, 111
  %v115 = vpop.permute.xlu0 %114
  %116 = vrot.lane.b32.xlu0 %v60, 111
  %v117 = vpop.permute.xlu0 %116
  %vm118 = vcmask 908288
  %v119 = vsel %vm118, %v113, %v115
  %v120 = vsel %vm118, %v115, %v117
  %123 = vst [vmem:[#allocation2 + $0x80] sm:$0xf] %v119
  %124 = vst [vmem:[#allocation2 + $0x88] sm:$0xf] %v120
  %125 = vrot.lane.b32.xlu0 %v59, 110
  %v126 = vpop.permute.xlu0 %125
  %127 = vrot.lane.b32.xlu0 %v62, 110
  %v128 = vpop.permute.xlu0 %127
  %129 = vrot.lane.b32.xlu0 %v60, 110
  %v130 = vpop.permute.xlu0 %129
  %vm131 = vcmask 900096
  %v132 = vsel %vm131, %v126, %v128
  %v133 = vsel %vm131, %v128, %v130
  %v136 = vsel %vm57, %v132, 0.0
  %v137 = vsel %vm58, %v133, 0.0
  %138 = vst [vmem:[#allocation2 + $0xa0] sm:$0xf] %v136
  %139 = vst [vmem:[#allocation2 + $0xa8] sm:$0xf] %v137
  %140 = vrot.lane.b32.xlu0 %v59, 96
  %v141 = vpop.permute.xlu0 %140
  %142 = vrot.lane.b32.xlu0 %v62, 96
  %v143 = vpop.permute.xlu0 %142
  %144 = vrot.lane.b32.xlu0 %v60, 96
  %v145 = vpop.permute.xlu0 %144
  %vm146 = vcmask 785408
  %v147 = vsel %vm146, %v141, %v143
  %v148 = vsel %vm146, %v143, %v145
  %v151 = vsel %vm55, %v147, 0.0
  %v152 = vsel %vm56, %v148, 0.0
  %153 = vst [vmem:[#allocation2 + $0xc0] sm:$0xf] %v151
  %154 = vst [vmem:[#allocation2 + $0xc8] sm:$0xf] %v152
  %155 = vrot.lane.b32.xlu0 %v59, 95
  %v156 = vpop.permute.xlu0 %155
  %157 = vrot.lane.b32.xlu0 %v62, 95
  %v158 = vpop.permute.xlu0 %157
  %159 = vrot.lane.b32.xlu0 %v60, 95
  %v160 = vpop.permute.xlu0 %159
  %vm161 = vcmask 777216
  %v162 = vsel %vm161, %v156, %v158
  %v163 = vsel %vm161, %v158, %v160
  %166 = vst [vmem:[#allocation2 + $0xe0] sm:$0xf] %v162
  %167 = vst [vmem:[#allocation2 + $0xe8] sm:$0xf] %v163
  %168 = vrot.lane.b32.xlu0 %v59, 94
  %v169 = vpop.permute.xlu0 %168
  %170 = vrot.lane.b32.xlu0 %v62, 94
  %v171 = vpop.permute.xlu0 %170
  %172 = vrot.lane.b32.xlu0 %v60, 94
  %v173 = vpop.permute.xlu0 %172
  %vm174 = vcmask 769024
  %v175 = vsel %vm174, %v169, %v171
  %v176 = vsel %vm174, %v171, %v173
  %v179 = vsel %vm57, %v175, 0.0
  %v180 = vsel %vm58, %v176, 0.0
  %181 = vst [vmem:[#allocation2 + $0x100] sm:$0xf] %v179
  %182 = vst [vmem:[#allocation2 + $0x108] sm:$0xf] %v180
  %s183 = scalar_lea.vmem %s0, 12
  %v184 = vld [vmem:[%s183] sm:$0xff]
  %v185 = vld [vmem:[%s183 + $0x8] sm:$0xf]
  %v187 = vcombine.high %v184, %v184
  %v189 = vsel %vm55, %v184, 0.0
  %v190 = vsel %vm56, %v187, 0.0
  %191 = vst [vmem:[#allocation2 + $0x10] sm:$0xf] %v189
  %192 = vst [vmem:[#allocation2 + $0x18] sm:$0xf] %v190
  %194 = vrot.lane.b32.xlu0 %v184, 127
  %v195 = vpop.permute.xlu0 %194
  %196 = vrot.lane.b32.xlu0 %v187, 127
  %v197 = vpop.permute.xlu0 %196
  %198 = vrot.lane.b32.xlu0 %v185, 127
  %v199 = vpop.permute.xlu0 %198
  %v200 = vsel %vm75, %v195, %v197
  %v201 = vsel %vm75, %v197, %v199
  %204 = vst [vmem:[#allocation2 + $0x30] sm:$0xf] %v200
  %205 = vst [vmem:[#allocation2 + $0x38] sm:$0xf] %v201
  %206 = vrot.lane.b32.xlu0 %v184, 126
  %v207 = vpop.permute.xlu0 %206
  %208 = vrot.lane.b32.xlu0 %v187, 126
  %v209 = vpop.permute.xlu0 %208
  %210 = vrot.lane.b32.xlu0 %v185, 126
  %v211 = vpop.permute.xlu0 %210
  %v212 = vsel %vm88, %v207, %v209
  %v213 = vsel %vm88, %v209, %v211
  %v216 = vsel %vm57, %v212, 0.0
  %v217 = vsel %vm58, %v213, 0.0
  %218 = vst [vmem:[#allocation2 + $0x50] sm:$0xf] %v216
  %219 = vst [vmem:[#allocation2 + $0x58] sm:$0xf] %v217
  %220 = vrot.lane.b32.xlu0 %v184, 112
  %v221 = vpop.permute.xlu0 %220
  %222 = vrot.lane.b32.xlu0 %v187, 112
  %v223 = vpop.permute.xlu0 %222
  %224 = vrot.lane.b32.xlu0 %v185, 112
  %v225 = vpop.permute.xlu0 %224
  %v226 = vsel %vm103, %v221, %v223
  %v227 = vsel %vm103, %v223, %v225
  %v230 = vsel %vm55, %v226, 0.0
  %v231 = vsel %vm56, %v227, 0.0
  %232 = vst [vmem:[#allocation2 + $0x70] sm:$0xf] %v230
  %233 = vst [vmem:[#allocation2 + $0x78] sm:$0xf] %v231
  %234 = vrot.lane.b32.xlu0 %v184, 111
  %v235 = vpop.permute.xlu0 %234
  %236 = vrot.lane.b32.xlu0 %v187, 111
  %v237 = vpop.permute.xlu0 %236
  %238 = vrot.lane.b32.xlu0 %v185, 111
  %v239 = vpop.permute.xlu0 %238
  %v240 = vsel %vm118, %v235, %v237
  %v241 = vsel %vm118, %v237, %v239
  %244 = vst [vmem:[#allocation2 + $0x90] sm:$0xf] %v240
  %245 = vst [vmem:[#allocation2 + $0x98] sm:$0xf] %v241
  %246 = vrot.lane.b32.xlu0 %v184, 110
  %v247 = vpop.permute.xlu0 %246
  %248 = vrot.lane.b32.xlu0 %v187, 110
  %v249 = vpop.permute.xlu0 %248
  %250 = vrot.lane.b32.xlu0 %v185, 110
  %v251 = vpop.permute.xlu0 %250
  %v252 = vsel %vm131, %v247, %v249
  %v253 = vsel %vm131, %v249, %v251
  %v256 = vsel %vm57, %v252, 0.0
  %v257 = vsel %vm58, %v253, 0.0
  %258 = vst [vmem:[#allocation2 + $0xb0] sm:$0xf] %v256
  %259 = vst [vmem:[#allocation2 + $0xb8] sm:$0xf] %v257
  %260 = vrot.lane.b32.xlu0 %v184, 96
  %v261 = vpop.permute.xlu0 %260
  %262 = vrot.lane.b32.xlu0 %v187, 96
  %v263 = vpop.permute.xlu0 %262
  %264 = vrot.lane.b32.xlu0 %v185, 96
  %v265 = vpop.permute.xlu0 %264
  %v266 = vsel %vm146, %v261, %v263
  %v267 = vsel %vm146, %v263, %v265
  %v270 = vsel %vm55, %v266, 0.0
  %v271 = vsel %vm56, %v267, 0.0
  %272 = vst [vmem:[#allocation2 + $0xd0] sm:$0xf] %v270
  %273 = vst [vmem:[#allocation2 + $0xd8] sm:$0xf] %v271
  %274 = vrot.lane.b32.xlu0 %v184, 95
  %v275 = vpop.permute.xlu0 %274
  %276 = vrot.lane.b32.xlu0 %v187, 95
  %v277 = vpop.permute.xlu0 %276
  %278 = vrot.lane.b32.xlu0 %v185, 95
  %v279 = vpop.permute.xlu0 %278
  %v280 = vsel %vm161, %v275, %v277
  %v281 = vsel %vm161, %v277, %v279
  %284 = vst [vmem:[#allocation2 + $0xf0] sm:$0xf] %v280
  %285 = vst [vmem:[#allocation2 + $0xf8] sm:$0xf] %v281
  %286 = vrot.lane.b32.xlu0 %v184, 94
  %v287 = vpop.permute.xlu0 %286
  %288 = vrot.lane.b32.xlu0 %v187, 94
  %v289 = vpop.permute.xlu0 %288
  %290 = vrot.lane.b32.xlu0 %v185, 94
  %v291 = vpop.permute.xlu0 %290
  %v292 = vsel %vm174, %v287, %v289
  %v293 = vsel %vm174, %v289, %v291
  %v296 = vsel %vm57, %v292, 0.0
  %v297 = vsel %vm58, %v293, 0.0
  %298 = vst [vmem:[#allocation2 + $0x110] sm:$0xf] %v296
  %299 = vst [vmem:[#allocation2 + $0x118] sm:$0xf] %v297
  %v300 = vld [vmem:[%s1] sm:$0xff]
  %v301 = vld [vmem:[#allocation2] sm:$0xff]
  %v302 = vld [vmem:[#allocation2 + $0x8] sm:$0xff]
  %v303 = vld [vmem:[#allocation2 + $0x10] sm:$0xff]
  %v304 = vld [vmem:[#allocation2 + $0x18] sm:$0xff]
  %v305 = vld [vmem:[#allocation2 + $0x20] sm:$0xff]
  %v306 = vld [vmem:[#allocation2 + $0x28] sm:$0xff]
  %v307 = vld [vmem:[#allocation2 + $0x30] sm:$0xff]
  %v308 = vld [vmem:[#allocation2 + $0x38] sm:$0xff]
  %v309 = vld [vmem:[#allocation2 + $0x40] sm:$0xff]
  %v310 = vld [vmem:[#allocation2 + $0x48] sm:$0xff]
  %v311 = vld [vmem:[#allocation2 + $0x50] sm:$0xff]
  %v312 = vld [vmem:[#allocation2 + $0x58] sm:$0xff]
  %v313 = vld [vmem:[#allocation2 + $0x60] sm:$0xff]
  %v314 = vld [vmem:[#allocation2 + $0x68] sm:$0xff]
  %v315 = vld [vmem:[#allocation2 + $0x70] sm:$0xff]
  %v316 = vld [vmem:[#allocation2 + $0x78] sm:$0xff]
  %v317 = vld [vmem:[#allocation2 + $0x80] sm:$0xff]
  %v318 = vld [vmem:[#allocation2 + $0x88] sm:$0xff]
  %v319 = vld [vmem:[#allocation2 + $0x90] sm:$0xff]
  %v320 = vld [vmem:[#allocation2 + $0x98] sm:$0xff]
  %v321 = vld [vmem:[#allocation2 + $0xa0] sm:$0xff]
  %v322 = vld [vmem:[#allocation2 + $0xa8] sm:$0xff]
  %v323 = vld [vmem:[#allocation2 + $0xb0] sm:$0xff]
  %v324 = vld [vmem:[#allocation2 + $0xb8] sm:$0xff]
  %v325 = vld [vmem:[#allocation2 + $0xc0] sm:$0xff]
  %v326 = vld [vmem:[#allocation2 + $0xc8] sm:$0xff]
  %v327 = vld [vmem:[#allocation2 + $0xd0] sm:$0xff]
  %v328 = vld [vmem:[#allocation2 + $0xd8] sm:$0xff]
  %v329 = vld [vmem:[#allocation2 + $0xe0] sm:$0xff]
  %v330 = vld [vmem:[#allocation2 + $0xe8] sm:$0xff]
  %v331 = vld [vmem:[#allocation2 + $0xf0] sm:$0xff]
  %v332 = vld [vmem:[#allocation2 + $0xf8] sm:$0xff]
  %v333 = vld [vmem:[#allocation2 + $0x100] sm:$0xff]
  %v334 = vld [vmem:[#allocation2 + $0x108] sm:$0xff]
  %v335 = vld [vmem:[#allocation2 + $0x110] sm:$0xff]
  %v336 = vld [vmem:[#allocation2 + $0x118] sm:$0xff]
  %vm337 = vcmask 588800
  %v339 = vsel %vm337, %v300, 0
  %341 = vmatprep.subr.mxu0 0.0
  %342 = vmatpush1.msra.mxu0 0.0
  %343 = vmatprep.subr.mxu0 0.0
  %344 = vmatpush1.msra.mxu0 0.0
  %345 = vmatprep.subr.mxu0 0.0
  %346 = vmatpush1.msra.mxu0 0.0
  %347 = vmatprep.subr.mxu0 0.0
  %348 = vmatpush1.msra.mxu0 0.0
  %349 = vmatprep.subr.mxu0 0.0
  %350 = vmatpush1.msra.mxu0 0.0
  %351 = vmatprep.subr.mxu0 0.0
  %352 = vmatpush1.msra.mxu0 0.0
  %353 = vmatprep.subr.mxu0 0.0
  %354 = vmatpush1.msra.mxu0 0.0
  %355 = vmatprep.subr.mxu0 %v334
  %356 = vmatpush1.msra.mxu0 %v333
  %357 = vmatprep.subr.mxu0 %v330
  %358 = vmatpush1.msra.mxu0 %v329
  %359 = vmatprep.subr.mxu0 %v326
  %360 = vmatpush1.msra.mxu0 %v325
  %361 = vmatprep.subr.mxu0 %v322
  %362 = vmatpush1.msra.mxu0 %v321
  %363 = vmatprep.subr.mxu0 %v318
  %364 = vmatpush1.msra.mxu0 %v317
  %365 = vmatprep.subr.mxu0 %v314
  %366 = vmatpush1.msra.mxu0 %v313
  %367 = vmatprep.subr.mxu0 %v310
  %368 = vmatpush1.msra.mxu0 %v309
  %369 = vmatprep.subr.mxu0 %v306
  %370 = vmatpush1.msra.mxu0 %v305
  %371 = vmatprep.subr.mxu0 %v302
  %372 = vmatpush1.msra.mxu0 %v301
  %373 = vmatprep.subr.mxu0 0.0
  %374 = vmatpush2.msra.mxu0 0.0
  %375 = vmatprep.subr.mxu0 0.0
  %376 = vmatpush2.msra.mxu0 0.0
  %377 = vmatprep.subr.mxu0 0.0
  %378 = vmatpush2.msra.mxu0 0.0
  %379 = vmatprep.subr.mxu0 0.0
  %380 = vmatpush2.msra.mxu0 0.0
  %381 = vmatprep.subr.mxu0 0.0
  %382 = vmatpush2.msra.mxu0 0.0
  %383 = vmatprep.subr.mxu0 0.0
  %384 = vmatpush2.msra.mxu0 0.0
  %385 = vmatprep.subr.mxu0 0.0
  %386 = vmatpush2.msra.mxu0 0.0
  %387 = vmatprep.subr.mxu0 0.0
  %388 = vmatpush2.msra.mxu0 0.0
  %389 = vmatprep.subr.mxu0 0.0
  %390 = vmatpush2.msra.mxu0 0.0
  %391 = vmatprep.subr.mxu0 0.0
  %392 = vmatpush2.msra.mxu0 0.0
  %393 = vmatprep.subr.mxu0 0.0
  %394 = vmatpush2.msra.mxu0 0.0
  %395 = vmatprep.subr.mxu0 0.0
  %396 = vmatpush2.msra.mxu0 0.0
  %397 = vmatprep.subr.mxu0 0.0
  %398 = vmatpush2.msra.mxu0 0.0
  %399 = vmatprep.subr.mxu0 0.0
  %400 = vmatpush2.msra.mxu0 0.0
  %401 = vmatprep.subr.mxu0 0.0
  %402 = vmatpush2.msra.mxu0 0.0
  %403 = vmatprep.subr.mxu0 0.0
  %404 = vmatpush2.msra.mxu0 0.0
  %405 = vmatprep.mubr.f32.mxu0 0.0
  %406 = vmatmul.mubr.f32.gmra.mxu0 %v339
  %v407 = vpop.f32.mrf.mxu0
  %v408 = vadd.f32 0.0, %v407
  %v409 = vpop.f32.mrf.mxu0
  %v410 = vadd.f32 0.0, %v409
  %411 = vdwg.mxu0
  %412 = vmatprep.subr.mxu0 0.0
  %413 = vmatpush1.msra.mxu0 0.0
  %414 = vmatprep.subr.mxu0 0.0
  %415 = vmatpush1.msra.mxu0 0.0
  %416 = vmatprep.subr.mxu0 0.0
  %417 = vmatpush1.msra.mxu0 0.0
  %418 = vmatprep.subr.mxu0 0.0
  %419 = vmatpush1.msra.mxu0 0.0
  %420 = vmatprep.subr.mxu0 0.0
  %421 = vmatpush1.msra.mxu0 0.0
  %422 = vmatprep.subr.mxu0 0.0
  %423 = vmatpush1.msra.mxu0 0.0
  %424 = vmatprep.subr.mxu0 0.0
  %425 = vmatpush1.msra.mxu0 0.0
  %426 = vmatprep.subr.mxu0 %v336
  %427 = vmatpush1.msra.mxu0 %v335
  %428 = vmatprep.subr.mxu0 %v332
  %429 = vmatpush1.msra.mxu0 %v331
  %430 = vmatprep.subr.mxu0 %v328
  %431 = vmatpush1.msra.mxu0 %v327
  %432 = vmatprep.subr.mxu0 %v324
  %433 = vmatpush1.msra.mxu0 %v323
  %434 = vmatprep.subr.mxu0 %v320
  %435 = vmatpush1.msra.mxu0 %v319
  %436 = vmatprep.subr.mxu0 %v316
  %437 = vmatpush1.msra.mxu0 %v315
  %438 = vmatprep.subr.mxu0 %v312
  %439 = vmatpush1.msra.mxu0 %v311
  %440 = vmatprep.subr.mxu0 %v308
  %441 = vmatpush1.msra.mxu0 %v307
  %442 = vmatprep.subr.mxu0 %v304
  %443 = vmatpush1.msra.mxu0 %v303
  %444 = vmatprep.subr.mxu0 0.0
  %445 = vmatpush2.msra.mxu0 0.0
  %446 = vmatprep.subr.mxu0 0.0
  %447 = vmatpush2.msra.mxu0 0.0
  %448 = vmatprep.subr.mxu0 0.0
  %449 = vmatpush2.msra.mxu0 0.0
  %450 = vmatprep.subr.mxu0 0.0
  %451 = vmatpush2.msra.mxu0 0.0
  %452 = vmatprep.subr.mxu0 0.0
  %453 = vmatpush2.msra.mxu0 0.0
  %454 = vmatprep.subr.mxu0 0.0
  %455 = vmatpush2.msra.mxu0 0.0
  %456 = vmatprep.subr.mxu0 0.0
  %457 = vmatpush2.msra.mxu0 0.0
  %458 = vmatprep.subr.mxu0 0.0
  %459 = vmatpush2.msra.mxu0 0.0
  %460 = vmatprep.subr.mxu0 0.0
  %461 = vmatpush2.msra.mxu0 0.0
  %462 = vmatprep.subr.mxu0 0.0
  %463 = vmatpush2.msra.mxu0 0.0
  %464 = vmatprep.subr.mxu0 0.0
  %465 = vmatpush2.msra.mxu0 0.0
  %466 = vmatprep.subr.mxu0 0.0
  %467 = vmatpush2.msra.mxu0 0.0
  %468 = vmatprep.subr.mxu0 0.0
  %469 = vmatpush2.msra.mxu0 0.0
  %470 = vmatprep.subr.mxu0 0.0
  %471 = vmatpush2.msra.mxu0 0.0
  %472 = vmatprep.subr.mxu0 0.0
  %473 = vmatpush2.msra.mxu0 0.0
  %474 = vmatprep.subr.mxu0 0.0
  %475 = vmatpush2.msra.mxu0 0.0
  %476 = vmatprep.mubr.f32.mxu0 0.0
  %477 = vmatmul.mubr.f32.gmra.mxu0 %v339
  %v478 = vpop.f32.mrf.mxu0
  %v479 = vadd.f32 0.0, %v478
  %v480 = vpop.f32.mrf.mxu0
  %v481 = vadd.f32 0.0, %v480
  %482 = vdwg.mxu0
  %v483 = vadd.f32 %v408, %v410
  %v484 = vadd.f32 %v483, %v479
  %v485 = vadd.f32 %v484, %v481
  %486 = vadd.xlane.f32.xlu0 %v485
  %v487 = vpop.xlane.xlu0 %486
  %v488 = vmul.f32 %v408, %v408
  %v489 = vmul.f32 %v410, %v410
  %v490 = vmul.f32 %v479, %v479
  %v491 = vmul.f32 %v481, %v481
  %v492 = vadd.f32 %v488, %v489
  %v493 = vadd.f32 %v492, %v490
  %v494 = vadd.f32 %v493, %v491
  %495 = vadd.xlane.f32.xlu0 %v494
  %v496 = vpop.xlane.xlu0 %495
  %v497 = vmul.f32 %v487, 0.001953125
  %v498 = vmul.f32 %v496, 0.001953125
  %v499 = vmul.f32 %v497, %v497
  %v500 = vsub.f32 %v498, %v499
  %v501 = vadd.f32 %v500, 1e-05
  %v502 = vrsqrt.pop %v501
  %v503 = vld [vmem:[%s2] sm:$0xff]
  %v504 = vmul.f32 %v503, %v502
  %v505 = vmul.f32 %v497, %v504
  %507 = vrot.lane.b32.xlu0 %v505, 1
  %v508 = vpop.permute.xlu0 %507
  %v510 = vsub.f32 %v503, %v508
  %512 = vset.pattern.permute.xlu0 0
  %513 = vperm.xlu0 %512, %v504
  %v514 = vpop.permute.xlu0 %513
  %v516 = vmul.f32 %v408, %v514
  %v517 = vmul.f32 %v410, %v514
  %v518 = vmul.f32 %v479, %v514
  %v519 = vmul.f32 %v481, %v514
  %521 = vset.pattern.permute.xlu0 1
  %522 = vperm.xlu0 %521, %v510
  %v523 = vpop.permute.xlu0 %522
  %v525 = vadd.f32 %v516, %v523
  %v526 = vadd.f32 %v517, %v523
  %v527 = vadd.f32 %v518, %v523
  %v528 = vadd.f32 %v519, %v523
  %v529 = vmax.f32 %v525, 0.0
  %v530 = vmax.f32 %v526, 0.0
  %v531 = vmax.f32 %v527, 0.0
  %v532 = vmax.f32 %v528, 0.0
  %533 = vst [vmem:[%s3] sm:$0xff] %v529
  %534 = vst [vmem:[%s3 + $0x8] sm:$0xff] %v530
  %s535 = scalar_lea.vmem %s3, 16
  %536 = vst [vmem:[%s535] sm:$0xff] %v531
  %537 = vst [vmem:[%s535 + $0x8] sm:$0xff] %v532
  // Predicated region
  $region14: #{conv_bn_relu.1} parent=0 // pred_check
    _
  $region15: #{conv_bn_relu.1} parent=0 // pred_check_branch
    %539 = sbr.rel (0) target = $region17
  $region16: #{conv_bn_relu.1} parent=0 // pred_region
    _
  $region17: #{conv_bn_relu.1} parent=0 // pred_fallthru
    _
  // Predicated region
  $region18: #{conv_bn_relu.1} parent=0 // pred_check
    _
  $region19: #{conv_bn_relu.1} parent=0 // pred_check_branch
    %541 = sbr.rel (0) target = $region21
  $region20: #{conv_bn_relu.1} parent=0 // pred_region
    _
  $region21: #{conv_bn_relu.1} parent=0 // pred_fallthru
    _

</llo_original>
